<compile_context>
chip_gen: v7x
topology: tpu7x:2x2x1
jax: 0.10.0
libtpu: 0.0.40
codegen_flags: <defaults>
</compile_context>

<pallas_src>
import jax
import jax.numpy as jnp
from jax.experimental import pallas as pl
from jax.experimental.pallas import tpu as pltpu


def _state_value_kernel(s_ref, w1_ref, b1_ref, w2_ref, b2_ref, w5_ref, b5_ref,
                        o_ref):
    # s_ref: (tile_b, obs) f32 streamed from HBM; cast to bf16 on the VPU here
    # (free under mem-bound) instead of a separate XLA cast pass in the wrapper.
    s = s_ref[...].astype(jnp.bfloat16)

    # fc1 + relu: bf16 MXU matmul, f32 accumulation, f32 epilogue.
    h1 = jnp.dot(s, w1_ref[...], preferred_element_type=jnp.float32)
    h1 = jnp.maximum(h1 + b1_ref[...], 0.0)                    # (tile_b, W)

    # fc2 + (Identity bn2) + relu.
    h2 = jnp.dot(h1.astype(jnp.bfloat16), w2_ref[...],
                 preferred_element_type=jnp.float32)
    h2 = jnp.maximum(h2 + b2_ref[...], 0.0)                    # (tile_b, W/2)

    # fc5 as (1, half) x (tile_b, half)^T -> (1, tile_b): the result is
    # lane-dense, so the output store uses full 128-lane vst's (no mask).
    out_row = jax.lax.dot_general(
        w5_ref[...], h2,
        dimension_numbers=(((1,), (1,)), ((), ())),            # NT contraction
        preferred_element_type=jnp.float32)                    # (1, tile_b)
    o_ref[...] = (out_row + b5_ref[0, 0]).astype(o_ref.dtype)  # b5 from SMEM


def prepare_params(params):
    """One-time dtype/layout conversion (do NOT call per forward pass)."""
    half = params["w2"].shape[1]
    return {
        "w1": params["w1"].astype(jnp.bfloat16),                 # (obs, W)
        "b1": params["b1"].astype(jnp.float32).reshape(1, -1),   # (1, W)
        "w2": params["w2"].astype(jnp.bfloat16),                 # (W, W/2)
        "b2": params["b2"].astype(jnp.float32).reshape(1, -1),   # (1, W/2)
        "w5": params["w5"].astype(jnp.float32).reshape(1, half),  # (1, W/2)
        "b5": params["b5"].astype(jnp.float32).reshape(1, 1),     # (1, 1) -> SMEM
    }


def state_value_forward(s, prepared, *, tile_b=1024):
    """s: (B, obs_count). prepared: output of prepare_params()."""
    B, obs = s.shape
    net_width = prepared["w1"].shape[1]
    half = prepared["w2"].shape[1]

    # Keep tile_b a multiple of 128 (lane-dense output) but don't overshoot a
    # small batch; the partial last input block is handled by Pallas (no pad).
    tile_b = min(tile_b, int(pl.cdiv(B, 128)) * 128)
    assert tile_b % 128 == 0, "tile_b must be a multiple of 128"

    n_tiles = int(pl.cdiv(B, tile_b))
    b_pad = n_tiles * tile_b

    s = s.astype(jnp.float32)   # stream f32; bf16 cast happens inside the kernel

    def resident(shape):
        # Small grid-invariant array: same block every step, stays in VMEM.
        return pl.BlockSpec(shape, lambda i: (0, 0))

    flops = 2 * B * (obs * net_width + net_width * half + half)
    bytes_accessed = (B * obs * 4 + B * 4                       # s in, out
                      + (obs * net_width + net_width * half) * 2  # bf16 weights
                      + (net_width + 2 * half + 1) * 4)           # biases + w5

    out = pl.pallas_call(
        _state_value_kernel,
        out_shape=jax.ShapeDtypeStruct((1, b_pad), jnp.float32),
        grid=(n_tiles,),
        in_specs=[
            pl.BlockSpec((tile_b, obs), lambda i: (i, 0)),        # s (streamed)
            resident((obs, net_width)),                           # w1
            resident((1, net_width)),                             # b1
            resident((net_width, half)),                          # w2
            resident((1, half)),                                  # b2
            resident((1, half)),                                  # w5 row
            pl.BlockSpec(memory_space=pltpu.MemorySpace.SMEM),    # b5 scalar
        ],
        out_specs=pl.BlockSpec((1, tile_b), lambda i: (0, i)),    # lane-dense
        compiler_params=pltpu.CompilerParams(
            dimension_semantics=("parallel",),
            vmem_limit_bytes=48 * 1024 * 1024,
        ),
        cost_estimate=pl.CostEstimate(
            flops=flops, transcendentals=0, bytes_accessed=bytes_accessed),
    )(s, prepared["w1"], prepared["b1"], prepared["w2"], prepared["b2"],
      prepared["w5"], prepared["b5"])

    # (1, b_pad) -> (B, 1); rows past B came from the garbage partial block and
    # are discarded (rows are independent, so they never touch valid rows).
    return out[0, :B].reshape(B, 1)


def init_params(key, net_width, obs_count):
    """Deterministic synthetic parameters (PyTorch-Linear init, transposed)."""
    k1, k2, k3, k4, k5, k6 = jax.random.split(key, 6)
    half = net_width // 2

    def lin(kw, kb, fan_in, fan_out):
        bound = 1.0 / jnp.sqrt(fan_in)
        # stored as (in, out) == W^T relative to torch's (out, in)
        w = jax.random.uniform(kw, (fan_in, fan_out), jnp.float32, -bound, bound)
        b = jax.random.uniform(kb, (1, fan_out), jnp.float32, -bound, bound)
        return w, b

    w1, b1 = lin(k1, k2, obs_count, net_width)
    w2, b2 = lin(k3, k4, net_width, half)
    w5, b5 = lin(k5, k6, half, 1)
    return {"w1": w1, "b1": b1, "w2": w2, "b2": b2, "w5": w5, "b5": b5}


def _reference(s, p):
    x = jnp.maximum(s @ p["w1"] + p["b1"], 0.0)
    x = jnp.maximum(x @ p["w2"] + p["b2"], 0.0)
    return x @ p["w5"] + p["b5"]


if __name__ == "__main__":
    key = jax.random.PRNGKey(0)
    k_s, k_p = jax.random.split(key)

    # Small demo: batch=200 with tile_b=128 gives a 2-step grid whose last block
    # is partial, exercising the no-pad path and the lane-dense output layout.
    batch, obs_count, net_width = 200, 16, 32
    s = jax.random.normal(k_s, (batch, obs_count), jnp.float32)
    params = init_params(k_p, net_width, obs_count)
    prepared = prepare_params(params)       # one-time conversion, cached

    out = state_value_forward(s, prepared, tile_b=128)
    jax.block_until_ready(out)

    ref = _reference(s, params)
    assert out.shape == (batch, 1), out.shape
    # bf16 matmul inputs with f32 accumulation => loose-ish tolerance.
    assert jnp.allclose(out, ref, atol=2e-2, rtol=2e-2), "mismatch vs reference"

    print("KERNEL_OK")
</pallas_src>

<mosaic_0001>
module attributes {stable_mosaic.version = 11 : i64} {
  func.func @_state_value_kernel(%arg0: i32, %arg1: memref<128x16xf32, #tpu.memory_space<vmem>>, %arg2: memref<16x32xbf16, #tpu.memory_space<vmem>>, %arg3: memref<1x32xf32, #tpu.memory_space<vmem>>, %arg4: memref<32x16xbf16, #tpu.memory_space<vmem>>, %arg5: memref<1x16xf32, #tpu.memory_space<vmem>>, %arg6: memref<1x16xf32, #tpu.memory_space<vmem>>, %arg7: memref<1x1xf32, #tpu.memory_space<smem>>, %arg8: memref<1x128xf32, #tpu.memory_space<vmem>>) attributes {dimension_semantics = [#tpu.dimension_semantics<parallel>], iteration_bounds = array<i64: 2>, scalar_prefetch = 0 : i64, scratch_operands = 0 : i64, tpu.core_type = #tpu.core_type<tc>, window_params = [{transform_indices = @transform_0, window_bounds = array<i64: 128, 16>}, {pipeline_mode = #tpu.pipeline_mode<synchronous>, transform_indices = @transform_1, window_bounds = array<i64: 16, 32>}, {pipeline_mode = #tpu.pipeline_mode<synchronous>, transform_indices = @transform_2, window_bounds = array<i64: 1, 32>}, {pipeline_mode = #tpu.pipeline_mode<synchronous>, transform_indices = @transform_3, window_bounds = array<i64: 32, 16>}, {pipeline_mode = #tpu.pipeline_mode<synchronous>, transform_indices = @transform_4, window_bounds = array<i64: 1, 16>}, {pipeline_mode = #tpu.pipeline_mode<synchronous>, transform_indices = @transform_5, window_bounds = array<i64: 1, 16>}, {transform_indices = @transform_6, window_bounds = array<i64: 1, 1>}, {transform_indices = @transform_7, window_bounds = array<i64: 1, 128>}]} {
    %c0 = arith.constant 0 : index
    %c0_0 = arith.constant 0 : index
    %0 = vector.load %arg1[%c0, %c0_0] : memref<128x16xf32, #tpu.memory_space<vmem>>, vector<128x16xf32>
    %1 = arith.truncf %0 : vector<128x16xf32> to vector<128x16xbf16>
    %c0_1 = arith.constant 0 : index
    %c0_2 = arith.constant 0 : index
    %2 = vector.load %arg2[%c0_1, %c0_2] : memref<16x32xbf16, #tpu.memory_space<vmem>>, vector<16x32xbf16>
    %cst = arith.constant dense<0.000000e+00> : vector<128x32xf32>
    %3 = tpu.matmul %1, %2, %cst {dimension_numbers = #tpu.dot_dimension_numbers<[1], [0], [0], [1], [0, 0, 1, 1], [], []>} : vector<128x16xbf16>, vector<16x32xbf16>, vector<128x32xf32> -> vector<128x32xf32>
    %c0_3 = arith.constant 0 : index
    %c0_4 = arith.constant 0 : index
    %4 = vector.load %arg3[%c0_3, %c0_4] : memref<1x32xf32, #tpu.memory_space<vmem>>, vector<1x32xf32>
    %5 = vector.broadcast %4 : vector<1x32xf32> to vector<128x32xf32>
    %6 = arith.addf %3, %5 : vector<128x32xf32>
    %cst_5 = arith.constant 0.000000e+00 : f32
    %7 = vector.broadcast %cst_5 : f32 to vector<128x32xf32>
    %8 = arith.maximumf %6, %7 : vector<128x32xf32>
    %9 = arith.truncf %8 : vector<128x32xf32> to vector<128x32xbf16>
    %c0_6 = arith.constant 0 : index
    %c0_7 = arith.constant 0 : index
    %10 = vector.load %arg4[%c0_6, %c0_7] : memref<32x16xbf16, #tpu.memory_space<vmem>>, vector<32x16xbf16>
    %cst_8 = arith.constant dense<0.000000e+00> : vector<128x16xf32>
    %11 = tpu.matmul %9, %10, %cst_8 {dimension_numbers = #tpu.dot_dimension_numbers<[1], [0], [0], [1], [0, 0, 1, 1], [], []>} : vector<128x32xbf16>, vector<32x16xbf16>, vector<128x16xf32> -> vector<128x16xf32>
    %c0_9 = arith.constant 0 : index
    %c0_10 = arith.constant 0 : index
    %12 = vector.load %arg5[%c0_9, %c0_10] : memref<1x16xf32, #tpu.memory_space<vmem>>, vector<1x16xf32>
    %13 = vector.broadcast %12 : vector<1x16xf32> to vector<128x16xf32>
    %14 = arith.addf %11, %13 : vector<128x16xf32>
    %cst_11 = arith.constant 0.000000e+00 : f32
    %15 = vector.broadcast %cst_11 : f32 to vector<128x16xf32>
    %16 = arith.maximumf %14, %15 : vector<128x16xf32>
    %c0_12 = arith.constant 0 : index
    %c0_13 = arith.constant 0 : index
    %17 = vector.load %arg6[%c0_12, %c0_13] : memref<1x16xf32, #tpu.memory_space<vmem>>, vector<1x16xf32>
    %cst_14 = arith.constant dense<0.000000e+00> : vector<1x128xf32>
    %18 = tpu.matmul %17, %16, %cst_14 {dimension_numbers = #tpu.dot_dimension_numbers<[1], [1], [0], [0], [0, 0, 1, 0], [], []>} : vector<1x16xf32>, vector<128x16xf32>, vector<1x128xf32> -> vector<1x128xf32>
    %c0_15 = arith.constant 0 : index
    %c0_16 = arith.constant 0 : index
    %19 = memref.load %arg7[%c0_15, %c0_16] : memref<1x1xf32, #tpu.memory_space<smem>>
    %20 = vector.broadcast %19 : f32 to vector<1x128xf32>
    %21 = arith.addf %18, %20 : vector<1x128xf32>
    %c0_17 = arith.constant 0 : index
    %c0_18 = arith.constant 0 : index
    %22 = vector.load %arg8[%c0_17, %c0_18] : memref<1x128xf32, #tpu.memory_space<vmem>>, vector<1x128xf32>
    tpu.vector_store %arg8[%c0_17, %c0_18], %21 {strides = array<i32>} : memref<1x128xf32, #tpu.memory_space<vmem>>, vector<1x128xf32>,
    return
  }
  func.func @transform_0(%arg0: i32) -> (i32, i32) {
    %c0_i32 = arith.constant 0 : i32
    %c0_i32_0 = arith.constant 0 : i32
    return %arg0, %c0_i32 : i32, i32
  }
  func.func @transform_1(%arg0: i32) -> (i32, i32) {
    %c0_i32 = arith.constant 0 : i32
    %c0_i32_0 = arith.constant 0 : i32
    %c0_i32_1 = arith.constant 0 : i32
    return %c0_i32, %c0_i32_0 : i32, i32
  }
  func.func @transform_2(%arg0: i32) -> (i32, i32) {
    %c0_i32 = arith.constant 0 : i32
    %c0_i32_0 = arith.constant 0 : i32
    %c0_i32_1 = arith.constant 0 : i32
    return %c0_i32, %c0_i32_0 : i32, i32
  }
  func.func @transform_3(%arg0: i32) -> (i32, i32) {
    %c0_i32 = arith.constant 0 : i32
    %c0_i32_0 = arith.constant 0 : i32
    %c0_i32_1 = arith.constant 0 : i32
    return %c0_i32, %c0_i32_0 : i32, i32
  }
  func.func @transform_4(%arg0: i32) -> (i32, i32) {
    %c0_i32 = arith.constant 0 : i32
    %c0_i32_0 = arith.constant 0 : i32
    %c0_i32_1 = arith.constant 0 : i32
    return %c0_i32, %c0_i32_0 : i32, i32
  }
  func.func @transform_5(%arg0: i32) -> (i32, i32) {
    %c0_i32 = arith.constant 0 : i32
    %c0_i32_0 = arith.constant 0 : i32
    %c0_i32_1 = arith.constant 0 : i32
    return %c0_i32, %c0_i32_0 : i32, i32
  }
  func.func @transform_6(%arg0: i32) -> (i32, i32) {
    %c0_i32 = arith.constant 0 : i32
    %c0_i32_0 = arith.constant 0 : i32
    %c0_i32_1 = arith.constant 0 : i32
    return %c0_i32, %c0_i32_0 : i32, i32
  }
  func.func @transform_7(%arg0: i32) -> (i32, i32) {
    %c0_i32 = arith.constant 0 : i32
    %c0_i32_0 = arith.constant 0 : i32
    return %c0_i32, %arg0 : i32, i32
  }
}

</mosaic_0001>

<llo_original>
// kernel: tpu_custom_call.1
$region0: #{tpu_custom_call.1}
  #allocation0 [shape = 'u32[]', space=smem, size = 0x4, offset = 0x4, fixed_abs, tag = 'smem constant byte address 0x4 - core index']
  #allocation1 [shape = 'u32[144,128]{1,0:T(1,128)}', space=vmem, size = 0x12000, scoped, tag = 'internal scratch']
  #allocation2 [shape = 'f32[1,1]{1,0:T(1,128)S(6)}', space=smem, size = 0x200, scoped, tag = 'scoped memory for tpu_custom_call.1']
  %s0 = inlined_call_operand.vmem [shape: f32[200,16], index: 0, kind: input, shape index: {}]
  %s1 = inlined_call_operand.vmem [shape: bf16[16,32], index: 1, kind: input, shape index: {}]
  %s2 = inlined_call_operand.vmem [shape: f32[1,32], index: 2, kind: input, shape index: {}]
  %s3 = inlined_call_operand.vmem [shape: bf16[32,16], index: 3, kind: input, shape index: {}]
  %s4 = inlined_call_operand.vmem [shape: f32[1,16], index: 4, kind: input, shape index: {}]
  %s5 = inlined_call_operand.vmem [shape: f32[1,16], index: 5, kind: input, shape index: {}]
  %s6 = inlined_call_operand.<no memory space> [shape: f32[1,1], index: 6, kind: input, shape index: {}]
  %s7 = inlined_call_operand.hbm [shape: f32[1,256], index: 7, kind: output, shape index: {}]
  %s8 = sld [smem:[#allocation0]]
  $region61: #{tpu_custom_call.1} parent=0
    _
  %s10 = ssub.s32 1, %s8
  %s11 = scalar_select 0, %s10, %s8
  %12 = sst [smem:[#allocation2]] %s6
  $region1: #{tpu_custom_call.1} parent=0
    #allocation3 [shape = 'u8[1024]{0}', space=vmem, size = 0x400, scoped, tag = 'output window, operand 0']
    #allocation4 [shape = 's32[2]{0}', space=sflag, size = 0x8, scoped, tag = 'scoped memory for tpu_custom_call.1']
    %13 = vsyncpa [#allocation4], 0
    %s14 = scalar_lea.sflag [#allocation4], 1
    %15 = vsyncpa %s14, 0
    loop: start=0, step=1, limit=4
    $region2: #{tpu_custom_call.1} parent=1 // loop_pre_header
      _
    $region3: #{tpu_custom_call.1} parent=1 // loop_header
      %s17 = sphi 0, %s21
      %p18 = scmp.ge.s32.totalorder %s17, 4
      %s27 = sphi 0, %s29
      %s30 = sphi 0, %s27
      %s31 = sphi 0, %s30
      %s47 = sphi 0, %s31
      %s51 = sphi 0, %s51
      %s53 = sphi 0, %s51
      %s54 = sphi 0, %s53
      %s68 = sphi 0, %s54
      %s72 = sphi 0, %s72
      %s74 = sphi 0, %s72
      %s75 = sphi 0, %s74
      %s89 = sphi 0, %s75
      %s93 = sphi 0, %s93
      %s95 = sphi 0, %s93
      %s96 = sphi 0, %s95
      %s110 = sphi 0, %s96
      %s114 = sphi 0, %s114
      %s116 = sphi 0, %s114
      %s117 = sphi 0, %s116
      %s131 = sphi 0, %s117
      %s135 = sphi 0, %s135
      %s137 = sphi 0, %s135
      %s138 = sphi 0, %s137
      %s152 = sphi 0, %s138
      %s156 = sphi 0, %s156
      %s158 = sphi 0, %s156
      %s159 = sphi 0, %s158
      %s173 = sphi 0, %s159
      %s179 = sphi 0, %s181
      %s182 = sphi 0, %s179
      %s183 = sphi 0, %s182
      %s199 = sphi 0, %s183
    $region4: #{tpu_custom_call.1} parent=1 // loop_header_branch
      %20 = sbr.rel (%p18) target = $region8
    $region5: #{tpu_custom_call.1} parent=1 // loop_body
      %s22 = ssub.s32 %s17, 1
      %s23 = ssub.s32 %s17, 2
      %s24 = sadd.s32 %s17, 1
      %s25 = ssub.s32 %s17, %s24
      %p26 = scmp.eq.s32.totalorder %s25, 0
      %s28 = sadd.s32 %s27, 1
      %s29 = scalar_select %p26, %s27, %s28
      %p32 = pneg %p26
      %p33 = scmp.eq.s32.totalorder %s17, 1
      %p34 = por %p32, %p33
      %p35 = scmp.ne.s32.totalorder %s27, %s30
      %p36 = scmp.eq.s32.totalorder %s17, 0
      %p37 = por %p35, %p36
      %p38 = scmp.ne.s32.totalorder %s27, %s30
      %p39 = scmp.eq.s32.totalorder %s22, 1
      %p40 = por %p38, %p39
      %p41 = scmp.ne.s32.totalorder %s30, %s31
      %p42 = scmp.eq.s32.totalorder %s22, 0
      %p43 = por %p41, %p42
      %p44 = scmp.ne.s32.totalorder %s30, %s31
      %p45 = scmp.eq.s32.totalorder %s23, 1
      %p46 = por %p44, %p45
      %p48 = scmp.ne.s32.totalorder %s31, %s47
      %p49 = scmp.eq.s32.totalorder %s23, 0
      %p50 = por %p48, %p49
      %s52 = sadd.s32 %s51, 1
      %p55 = scmp.eq.s32.totalorder %s17, 1
      %p56 = scmp.ne.s32.totalorder %s51, %s53
      %p57 = scmp.eq.s32.totalorder %s17, 0
      %p58 = por %p56, %p57
      %p59 = scmp.ne.s32.totalorder %s51, %s53
      %p60 = scmp.eq.s32.totalorder %s22, 1
      %p61 = por %p59, %p60
      %p62 = scmp.ne.s32.totalorder %s53, %s54
      %p63 = scmp.eq.s32.totalorder %s22, 0
      %p64 = por %p62, %p63
      %p65 = scmp.ne.s32.totalorder %s53, %s54
      %p66 = scmp.eq.s32.totalorder %s23, 1
      %p67 = por %p65, %p66
      %p69 = scmp.ne.s32.totalorder %s54, %s68
      %p70 = scmp.eq.s32.totalorder %s23, 0
      %p71 = por %p69, %p70
      %s73 = sadd.s32 %s72, 1
      %p76 = scmp.eq.s32.totalorder %s17, 1
      %p77 = scmp.ne.s32.totalorder %s72, %s74
      %p78 = scmp.eq.s32.totalorder %s17, 0
      %p79 = por %p77, %p78
      %p80 = scmp.ne.s32.totalorder %s72, %s74
      %p81 = scmp.eq.s32.totalorder %s22, 1
      %p82 = por %p80, %p81
      %p83 = scmp.ne.s32.totalorder %s74, %s75
      %p84 = scmp.eq.s32.totalorder %s22, 0
      %p85 = por %p83, %p84
      %p86 = scmp.ne.s32.totalorder %s74, %s75
      %p87 = scmp.eq.s32.totalorder %s23, 1
      %p88 = por %p86, %p87
      %p90 = scmp.ne.s32.totalorder %s75, %s89
      %p91 = scmp.eq.s32.totalorder %s23, 0
      %p92 = por %p90, %p91
      %s94 = sadd.s32 %s93, 1
      %p97 = scmp.eq.s32.totalorder %s17, 1
      %p98 = scmp.ne.s32.totalorder %s93, %s95
      %p99 = scmp.eq.s32.totalorder %s17, 0
      %p100 = por %p98, %p99
      %p101 = scmp.ne.s32.totalorder %s93, %s95
      %p102 = scmp.eq.s32.totalorder %s22, 1
      %p103 = por %p101, %p102
      %p104 = scmp.ne.s32.totalorder %s95, %s96
      %p105 = scmp.eq.s32.totalorder %s22, 0
      %p106 = por %p104, %p105
      %p107 = scmp.ne.s32.totalorder %s95, %s96
      %p108 = scmp.eq.s32.totalorder %s23, 1
      %p109 = por %p107, %p108
      %p111 = scmp.ne.s32.totalorder %s96, %s110
      %p112 = scmp.eq.s32.totalorder %s23, 0
      %p113 = por %p111, %p112
      %s115 = sadd.s32 %s114, 1
      %p118 = scmp.eq.s32.totalorder %s17, 1
      %p119 = scmp.ne.s32.totalorder %s114, %s116
      %p120 = scmp.eq.s32.totalorder %s17, 0
      %p121 = por %p119, %p120
      %p122 = scmp.ne.s32.totalorder %s114, %s116
      %p123 = scmp.eq.s32.totalorder %s22, 1
      %p124 = por %p122, %p123
      %p125 = scmp.ne.s32.totalorder %s116, %s117
      %p126 = scmp.eq.s32.totalorder %s22, 0
      %p127 = por %p125, %p126
      %p128 = scmp.ne.s32.totalorder %s116, %s117
      %p129 = scmp.eq.s32.totalorder %s23, 1
      %p130 = por %p128, %p129
      %p132 = scmp.ne.s32.totalorder %s117, %s131
      %p133 = scmp.eq.s32.totalorder %s23, 0
      %p134 = por %p132, %p133
      %s136 = sadd.s32 %s135, 1
      %p139 = scmp.eq.s32.totalorder %s17, 1
      %p140 = scmp.ne.s32.totalorder %s135, %s137
      %p141 = scmp.eq.s32.totalorder %s17, 0
      %p142 = por %p140, %p141
      %p143 = scmp.ne.s32.totalorder %s135, %s137
      %p144 = scmp.eq.s32.totalorder %s22, 1
      %p145 = por %p143, %p144
      %p146 = scmp.ne.s32.totalorder %s137, %s138
      %p147 = scmp.eq.s32.totalorder %s22, 0
      %p148 = por %p146, %p147
      %p149 = scmp.ne.s32.totalorder %s137, %s138
      %p150 = scmp.eq.s32.totalorder %s23, 1
      %p151 = por %p149, %p150
      %p153 = scmp.ne.s32.totalorder %s138, %s152
      %p154 = scmp.eq.s32.totalorder %s23, 0
      %p155 = por %p153, %p154
      %s157 = sadd.s32 %s156, 1
      %p160 = scmp.eq.s32.totalorder %s17, 1
      %p161 = scmp.ne.s32.totalorder %s156, %s158
      %p162 = scmp.eq.s32.totalorder %s17, 0
      %p163 = por %p161, %p162
      %p164 = scmp.ne.s32.totalorder %s156, %s158
      %p165 = scmp.eq.s32.totalorder %s22, 1
      %p166 = por %p164, %p165
      %p167 = scmp.ne.s32.totalorder %s158, %s159
      %p168 = scmp.eq.s32.totalorder %s22, 0
      %p169 = por %p167, %p168
      %p170 = scmp.ne.s32.totalorder %s158, %s159
      %p171 = scmp.eq.s32.totalorder %s23, 1
      %p172 = por %p170, %p171
      %p174 = scmp.ne.s32.totalorder %s159, %s173
      %p175 = scmp.eq.s32.totalorder %s23, 0
      %p176 = por %p174, %p175
      %s177 = ssub.s32 %s17, %s24
      %p178 = scmp.eq.s32.totalorder %s177, 0
      %s180 = sadd.s32 %s179, 1
      %s181 = scalar_select %p178, %s179, %s180
      %p184 = pneg %p178
      %p185 = scmp.eq.s32.totalorder %s17, 1
      %p186 = por %p184, %p185
      %p187 = scmp.ne.s32.totalorder %s179, %s182
      %p188 = scmp.eq.s32.totalorder %s17, 0
      %p189 = por %p187, %p188
      %p190 = scmp.ne.s32.totalorder %s179, %s182
      %p191 = scmp.eq.s32.totalorder %s22, 1
      %p192 = por %p190, %p191
      %p193 = scmp.ne.s32.totalorder %s182, %s183
      %p194 = scmp.eq.s32.totalorder %s22, 0
      %p195 = por %p193, %p194
      %p196 = scmp.ne.s32.totalorder %s182, %s183
      %p197 = scmp.eq.s32.totalorder %s23, 1
      %p198 = por %p196, %p197
      %p200 = scmp.ne.s32.totalorder %s183, %s199
      %p201 = scmp.eq.s32.totalorder %s23, 0
      %p202 = por %p200, %p201
      %p203 = scmp.le.s32.totalorder 1, %s17
      %p204 = scmp.lt.s32.totalorder %s17, 3
      %p205 = pnand %p203, %p204
      %p206 = pneg %p205
      // Predicated region
      $region9: #{tpu_custom_call.1} parent=5 // pred_check
        _
      $region10: #{tpu_custom_call.1} parent=5 // pred_check_branch
        %208 = sbr.rel (%p205) target = $region12
      $region11: #{tpu_custom_call.1} parent=5 // pred_region
        %s209 = ssub.s32 %s17, 1
        // Predicated region
        $region13: #{tpu_custom_call.1} parent=11 // pred_check
          %p210 = pneg %p64
        $region14: #{tpu_custom_call.1} parent=11 // pred_check_branch
          %212 = sbr.rel (%p210) target = $region16
        $region15: #{tpu_custom_call.1} parent=11 // pred_region
          _
        $region16: #{tpu_custom_call.1} parent=11 // pred_fallthru
          _
        // Predicated region
        $region17: #{tpu_custom_call.1} parent=11 // pred_check
          %p213 = pneg %p85
        $region18: #{tpu_custom_call.1} parent=11 // pred_check_branch
          %215 = sbr.rel (%p213) target = $region20
        $region19: #{tpu_custom_call.1} parent=11 // pred_region
          _
        $region20: #{tpu_custom_call.1} parent=11 // pred_fallthru
          _
        // Predicated region
        $region21: #{tpu_custom_call.1} parent=11 // pred_check
          %p216 = pneg %p106
        $region22: #{tpu_custom_call.1} parent=11 // pred_check_branch
          %218 = sbr.rel (%p216) target = $region24
        $region23: #{tpu_custom_call.1} parent=11 // pred_region
          _
        $region24: #{tpu_custom_call.1} parent=11 // pred_fallthru
          _
        // Predicated region
        $region25: #{tpu_custom_call.1} parent=11 // pred_check
          %p219 = pneg %p127
        $region26: #{tpu_custom_call.1} parent=11 // pred_check_branch
          %221 = sbr.rel (%p219) target = $region28
        $region27: #{tpu_custom_call.1} parent=11 // pred_region
          _
        $region28: #{tpu_custom_call.1} parent=11 // pred_fallthru
          _
        // Predicated region
        $region29: #{tpu_custom_call.1} parent=11 // pred_check
          %p222 = pneg %p148
        $region30: #{tpu_custom_call.1} parent=11 // pred_check_branch
          %224 = sbr.rel (%p222) target = $region32
        $region31: #{tpu_custom_call.1} parent=11 // pred_region
          _
        $region32: #{tpu_custom_call.1} parent=11 // pred_fallthru
          _
        // Predicated region
        $region33: #{tpu_custom_call.1} parent=11 // pred_check
          %p225 = pneg %p169
        $region34: #{tpu_custom_call.1} parent=11 // pred_check_branch
          %227 = sbr.rel (%p225) target = $region36
        $region35: #{tpu_custom_call.1} parent=11 // pred_region
          _
        $region36: #{tpu_custom_call.1} parent=11 // pred_fallthru
          _
      $region12: #{tpu_custom_call.1} parent=5 // pred_fallthru
        _
      %p228 = scmp.lt.s32.totalorder %s17, 2
      // Predicated region
      $region37: #{tpu_custom_call.1} parent=5 // pred_check
        %p229 = pneg %p228
      $region38: #{tpu_custom_call.1} parent=5 // pred_check_branch
        %231 = sbr.rel (%p229) target = $region40
      $region39: #{tpu_custom_call.1} parent=5 // pred_region
        // Predicated region
        $region41: #{tpu_custom_call.1} parent=39 // pred_check
          %p232 = pneg %p37
        $region42: #{tpu_custom_call.1} parent=39 // pred_check_branch
          %234 = sbr.rel (%p232) target = $region44
        $region43: #{tpu_custom_call.1} parent=39 // pred_region
          %s235 = smul.u32 16, %s17
          %s236 = ssub.s32 25, %s235
          %p237 = scmp.lt.s32.totalorder %s236, 16
          %s238 = scalar_select %p237, %s236, 16
          %s239 = smul.u32 128, %s238
          %p240 = scmp.lt.s32.totalorder %s235, 24
          %s241 = scalar_select %p240, %s235, 24
          %s242 = smul.addr %s241, 8
          %s243 = scalar_lea.vmem %s0, %s242
          %s244 = smul.u32 16, %s17
          %s245 = ssub.s32 25, %s244
          %p246 = scmp.lt.s32.totalorder %s245, 16
          %s247 = scalar_select %p246, %s245, 16
          %s248 = smul.u32 128, %s247
        $region44: #{tpu_custom_call.1} parent=39 // pred_fallthru
          _
      $region40: #{tpu_custom_call.1} parent=5 // pred_fallthru
        _
      %p249 = scmp.le.s32.totalorder 1, %s17
      %p250 = scmp.lt.s32.totalorder %s17, 3
      %p251 = pnand %p249, %p250
      %p252 = pneg %p251
      // Predicated region
      $region45: #{tpu_custom_call.1} parent=5 // pred_check
        _
      $region46: #{tpu_custom_call.1} parent=5 // pred_check_branch
        %254 = sbr.rel (%p251) target = $region48
      $region47: #{tpu_custom_call.1} parent=5 // pred_region
        %s255 = ssub.s32 %s17, 1
        %s256 = smul.u32 16, %s22
        %s257 = ssub.s32 25, %s256
        %p258 = scmp.lt.s32.totalorder %s257, 16
        %s259 = scalar_select %p258, %s257, 16
        %s260 = smul.u32 128, %s259
        %p261 = scmp.lt.s32.totalorder %s256, 24
        %s262 = scalar_select %p261, %s256, 24
        %s263 = smul.addr %s262, 8
        %s264 = scalar_lea.vmem %s0, %s263
        %p265 = pneg %p43
        %p266 = pneg %p40
        %p267 = pneg %p64
        %p268 = pneg %p61
        %p269 = pneg %p85
        %p270 = pneg %p82
        %p271 = pneg %p106
        %p272 = pneg %p103
        %p273 = pneg %p127
        %p274 = pneg %p124
        %p275 = pneg %p148
        %p276 = pneg %p145
        %p277 = pneg %p169
        %p278 = pneg %p166
        %p279 = pneg %p195
        %p280 = pneg %p192
        %s281 = sand.u32 %s182, 1
        %s282 = scalar_lea.sflag [#allocation4], %s281
        %s283 = sand.u32 %s182, 1
        %s284 = scalar_lea.vmem [#allocation3], %s283
        %s285 = smul.u32 16, %s22
        %s286 = ssub.s32 25, %s285
        %p287 = scmp.lt.s32.totalorder %s286, 16
        %s288 = scalar_select %p287, %s286, 16
        %s289 = smul.u32 128, %s288
        %p290 = scmp.lt.s32.totalorder %s285, 24
        %s291 = scalar_select %p290, %s285, 24
        %s292 = smul.addr %s291, 8
        %s293 = scalar_lea.vmem %s0, %s292
        %s294 = smul.u32 16, %s22
        %s295 = ssub.s32 25, %s294
        %p296 = scmp.lt.s32.totalorder %s295, 16
        %s297 = scalar_select %p296, %s295, 16
        %s298 = smul.u32 128, %s297
        %v300 = vld [vmem:[%s293] sm:$0xff]
        %v301 = vld [vmem:[%s293 + $0x8] sm:$0xff]
        %v302 = vld [vmem:[%s293 + $0x10] sm:$0xff]
        %v303 = vld [vmem:[%s293 + $0x18] sm:$0xff]
        %v304 = vld [vmem:[%s293 + $0x20] sm:$0xff]
        %v305 = vld [vmem:[%s293 + $0x28] sm:$0xff]
        %v306 = vld [vmem:[%s293 + $0x30] sm:$0xff]
        %v307 = vld [vmem:[%s293 + $0x38] sm:$0xff]
        %v308 = vld [vmem:[%s293 + $0x40] sm:$0xff]
        %v309 = vld [vmem:[%s293 + $0x48] sm:$0xff]
        %v310 = vld [vmem:[%s293 + $0x50] sm:$0xff]
        %v311 = vld [vmem:[%s293 + $0x58] sm:$0xff]
        %v312 = vld [vmem:[%s293 + $0x60] sm:$0xff]
        %v313 = vld [vmem:[%s293 + $0x68] sm:$0xff]
        %v314 = vld [vmem:[%s293 + $0x70] sm:$0xff]
        %v315 = vld [vmem:[%s293 + $0x78] sm:$0xff]
        %v316 = vpack.c.bf16 %v301, %v300
        %v317 = vpack.c.bf16 %v303, %v302
        %v318 = vpack.c.bf16 %v305, %v304
        %v319 = vpack.c.bf16 %v307, %v306
        %v320 = vpack.c.bf16 %v309, %v308
        %v321 = vpack.c.bf16 %v311, %v310
        %v322 = vpack.c.bf16 %v313, %v312
        %v323 = vpack.c.bf16 %v315, %v314
        %v324 = vld [vmem:[%s1] sm:$0xf]
        %v325 = vld [vmem:[%s1 + $0x4] sm:$0xf]
        %v326 = vld [vmem:[%s2] sm:$0x1]
        %v328 = vlaneseq
        %v329 = vshrl.u32 %v328, 7
        %v330 = vsub.s32 0, %v329
        %v331 = vrot.slane %v326, %v330
        %v335 = vunpack.c.l.b16 %v324
        %v336 = vunpack.c.l.b16 %v325
        %v337 = vpack.c.b16 %v336, %v335
        %vm339 = vcmask 130048
        %v341 = vsel %vm339, %v316, 0
        %v344 = vsel %vm339, %v317, 0
        %v347 = vsel %vm339, %v318, 0
        %v350 = vsel %vm339, %v319, 0
        %v353 = vsel %vm339, %v320, 0
        %v356 = vsel %vm339, %v321, 0
        %v359 = vsel %vm339, %v322, 0
        %v362 = vsel %vm339, %v323, 0
        %364 = vmatprep.subr.bf16.mxu0 0
        %365 = vmatpush1.bf16.msra.mxu0 %v337
        %366 = vmatprep.subr.bf16.mxu0 0
        %367 = vmatpush1.bf16.msra.mxu0 0
        %368 = vmatprep.subr.bf16.mxu0 0
        %369 = vmatpush1.bf16.msra.mxu0 0
        %370 = vmatprep.subr.bf16.mxu0 0
        %371 = vmatpush1.bf16.msra.mxu0 0
        %372 = vmatprep.subr.bf16.mxu0 0
        %373 = vmatpush1.bf16.msra.mxu0 0
        %374 = vmatprep.subr.bf16.mxu0 0
        %375 = vmatpush1.bf16.msra.mxu0 0
        %376 = vmatprep.subr.bf16.mxu0 0
        %377 = vmatpush1.bf16.msra.mxu0 0
        %378 = vmatprep.subr.bf16.mxu0 0
        %379 = vmatpush1.bf16.msra.mxu0 0
        %380 = vmatprep.subr.bf16.mxu0 0
        %381 = vmatpush1.bf16.msra.mxu0 0
        %382 = vmatprep.subr.bf16.mxu0 0
        %383 = vmatpush1.bf16.msra.mxu0 0
        %384 = vmatprep.subr.bf16.mxu0 0
        %385 = vmatpush1.bf16.msra.mxu0 0
        %386 = vmatprep.subr.bf16.mxu0 0
        %387 = vmatpush1.bf16.msra.mxu0 0
        %388 = vmatprep.subr.bf16.mxu0 0
        %389 = vmatpush1.bf16.msra.mxu0 0
        %390 = vmatprep.subr.bf16.mxu0 0
        %391 = vmatpush1.bf16.msra.mxu0 0
        %392 = vmatprep.subr.bf16.mxu0 0
        %393 = vmatpush1.bf16.msra.mxu0 0
        %394 = vmatprep.subr.bf16.mxu0 0
        %395 = vmatpush1.bf16.msra.mxu0 0
        %396 = vmatprep.mubr.bf16.mxu0 0
        %397 = vmatmul.mubr.bf16.gmra.mrb[0].mxu0 %v341
        %v398 = vpop.f32.mrb[0].mxu0
        %v399 = vadd.f32 %v331, %v398
        %v400 = vpop.f32.mrb[0].mxu0
        %v401 = vpop.f32.mrb[0].mxu0
        %v402 = vadd.f32 %v331, %v401
        %v403 = vpop.f32.mrb[0].mxu0
        %404 = vmatprep.mubr.bf16.mxu0 0
        %405 = vmatmul.mubr.bf16.gmra.mrb[0].mxu0 %v344
        %v406 = vpop.f32.mrb[0].mxu0
        %v407 = vadd.f32 %v331, %v406
        %v408 = vpop.f32.mrb[0].mxu0
        %v409 = vpop.f32.mrb[0].mxu0
        %v410 = vadd.f32 %v331, %v409
        %v411 = vpop.f32.mrb[0].mxu0
        %412 = vmatprep.mubr.bf16.mxu0 0
        %413 = vmatmul.mubr.bf16.gmra.mrb[0].mxu0 %v347
        %v414 = vpop.f32.mrb[0].mxu0
        %v415 = vadd.f32 %v331, %v414
        %v416 = vpop.f32.mrb[0].mxu0
        %v417 = vpop.f32.mrb[0].mxu0
        %v418 = vadd.f32 %v331, %v417
        %v419 = vpop.f32.mrb[0].mxu0
        %420 = vmatprep.mubr.bf16.mxu0 0
        %421 = vmatmul.mubr.bf16.gmra.mrb[0].mxu0 %v350
        %v422 = vpop.f32.mrb[0].mxu0
        %v423 = vadd.f32 %v331, %v422
        %v424 = vpop.f32.mrb[0].mxu0
        %v425 = vpop.f32.mrb[0].mxu0
        %v426 = vadd.f32 %v331, %v425
        %v427 = vpop.f32.mrb[0].mxu0
        %428 = vmatprep.mubr.bf16.mxu0 0
        %429 = vmatmul.mubr.bf16.gmra.mrb[0].mxu0 %v353
        %v430 = vpop.f32.mrb[0].mxu0
        %v431 = vadd.f32 %v331, %v430
        %v432 = vpop.f32.mrb[0].mxu0
        %v433 = vpop.f32.mrb[0].mxu0
        %v434 = vadd.f32 %v331, %v433
        %v435 = vpop.f32.mrb[0].mxu0
        %436 = vmatprep.mubr.bf16.mxu0 0
        %437 = vmatmul.mubr.bf16.gmra.mrb[0].mxu0 %v356
        %v438 = vpop.f32.mrb[0].mxu0
        %v439 = vadd.f32 %v331, %v438
        %v440 = vpop.f32.mrb[0].mxu0
        %v441 = vpop.f32.mrb[0].mxu0
        %v442 = vadd.f32 %v331, %v441
        %v443 = vpop.f32.mrb[0].mxu0
        %444 = vmatprep.mubr.bf16.mxu0 0
        %445 = vmatmul.mubr.bf16.gmra.mrb[0].mxu0 %v359
        %v446 = vpop.f32.mrb[0].mxu0
        %v447 = vadd.f32 %v331, %v446
        %v448 = vpop.f32.mrb[0].mxu0
        %v449 = vpop.f32.mrb[0].mxu0
        %v450 = vadd.f32 %v331, %v449
        %v451 = vpop.f32.mrb[0].mxu0
        %452 = vmatprep.mubr.bf16.mxu0 0
        %453 = vmatmul.mubr.bf16.gmra.mrb[0].mxu0 %v362
        %v454 = vpop.f32.mrb[0].mxu0
        %v455 = vadd.f32 %v331, %v454
        %v456 = vpop.f32.mrb[0].mxu0
        %v457 = vpop.f32.mrb[0].mxu0
        %v458 = vadd.f32 %v331, %v457
        %v459 = vpop.f32.mrb[0].mxu0
        %460 = vdwg.mxu0
        %v461 = vmax.f32 %v399, 0.0
        %v462 = vmax.f32 %v402, 0.0
        %v463 = vmax.f32 %v407, 0.0
        %v464 = vmax.f32 %v410, 0.0
        %v465 = vmax.f32 %v415, 0.0
        %v466 = vmax.f32 %v418, 0.0
        %v467 = vmax.f32 %v423, 0.0
        %v468 = vmax.f32 %v426, 0.0
        %v469 = vmax.f32 %v431, 0.0
        %v470 = vmax.f32 %v434, 0.0
        %v471 = vmax.f32 %v439, 0.0
        %v472 = vmax.f32 %v442, 0.0
        %v473 = vmax.f32 %v447, 0.0
        %v474 = vmax.f32 %v450, 0.0
        %v475 = vmax.f32 %v455, 0.0
        %v476 = vmax.f32 %v458, 0.0
        %v477 = vpack.c.bf16 %v462, %v461
        %v478 = vpack.c.bf16 %v464, %v463
        %v479 = vpack.c.bf16 %v466, %v465
        %v480 = vpack.c.bf16 %v468, %v467
        %v481 = vpack.c.bf16 %v470, %v469
        %v482 = vpack.c.bf16 %v472, %v471
        %v483 = vpack.c.bf16 %v474, %v473
        %v484 = vpack.c.bf16 %v476, %v475
        %v485 = vld [vmem:[%s3] sm:$0xf]
        %v486 = vld [vmem:[%s3 + $0x4] sm:$0xf]
        %v487 = vld [vmem:[%s3 + $0x8] sm:$0xf]
        %v488 = vld [vmem:[%s3 + $0xc] sm:$0xf]
        %v489 = vld [vmem:[%s4] sm:$0x1]
        %v491 = vlaneseq
        %v492 = vshrl.u32 %v491, 7
        %v493 = vsub.s32 0, %v492
        %v494 = vrot.slane %v489, %v493
        %v500 = vunpack.c.l.b16 %v485
        %v501 = vunpack.c.l.b16 %v486
        %v502 = vunpack.c.l.b16 %v487
        %v503 = vunpack.c.l.b16 %v488
        %v504 = vpack.c.b16 %v501, %v500
        %v505 = vpack.c.b16 %v503, %v502
        %vm508 = vcmask 261120
        %v510 = vsel %vm508, %v477, 0
        %v513 = vsel %vm508, %v478, 0
        %v516 = vsel %vm508, %v479, 0
        %v519 = vsel %vm508, %v480, 0
        %v522 = vsel %vm508, %v481, 0
        %v525 = vsel %vm508, %v482, 0
        %v528 = vsel %vm508, %v483, 0
        %v531 = vsel %vm508, %v484, 0
        %533 = vmatprep.subr.bf16.mxu0 0
        %534 = vmatpush1.bf16.msra.mxu0 %v504
        %535 = vmatprep.subr.bf16.mxu0 0
        %536 = vmatpush1.bf16.msra.mxu0 %v505
        %537 = vmatprep.subr.bf16.mxu0 0
        %538 = vmatpush1.bf16.msra.mxu0 0
        %539 = vmatprep.subr.bf16.mxu0 0
        %540 = vmatpush1.bf16.msra.mxu0 0
        %541 = vmatprep.subr.bf16.mxu0 0
        %542 = vmatpush1.bf16.msra.mxu0 0
        %543 = vmatprep.subr.bf16.mxu0 0
        %544 = vmatpush1.bf16.msra.mxu0 0
        %545 = vmatprep.subr.bf16.mxu0 0
        %546 = vmatpush1.bf16.msra.mxu0 0
        %547 = vmatprep.subr.bf16.mxu0 0
        %548 = vmatpush1.bf16.msra.mxu0 0
        %549 = vmatprep.subr.bf16.mxu0 0
        %550 = vmatpush1.bf16.msra.mxu0 0
        %551 = vmatprep.subr.bf16.mxu0 0
        %552 = vmatpush1.bf16.msra.mxu0 0
        %553 = vmatprep.subr.bf16.mxu0 0
        %554 = vmatpush1.bf16.msra.mxu0 0
        %555 = vmatprep.subr.bf16.mxu0 0
        %556 = vmatpush1.bf16.msra.mxu0 0
        %557 = vmatprep.subr.bf16.mxu0 0
        %558 = vmatpush1.bf16.msra.mxu0 0
        %559 = vmatprep.subr.bf16.mxu0 0
        %560 = vmatpush1.bf16.msra.mxu0 0
        %561 = vmatprep.subr.bf16.mxu0 0
        %562 = vmatpush1.bf16.msra.mxu0 0
        %563 = vmatprep.subr.bf16.mxu0 0
        %564 = vmatpush1.bf16.msra.mxu0 0
        %565 = vmatprep.mubr.bf16.mxu0 0
        %566 = vmatmul.mubr.bf16.gmra.mrb[0].mxu0 %v510
        %v567 = vpop.f32.mrb[0].mxu0
        %v568 = vadd.f32 %v494, %v567
        %v569 = vpop.f32.mrb[0].mxu0
        %v570 = vpop.f32.mrb[0].mxu0
        %v571 = vadd.f32 %v494, %v570
        %v572 = vpop.f32.mrb[0].mxu0
        %573 = vmatprep.mubr.bf16.mxu0 0
        %574 = vmatmul.mubr.bf16.gmra.mrb[0].mxu0 %v513
        %v575 = vpop.f32.mrb[0].mxu0
        %v576 = vadd.f32 %v494, %v575
        %v577 = vpop.f32.mrb[0].mxu0
        %v578 = vpop.f32.mrb[0].mxu0
        %v579 = vadd.f32 %v494, %v578
        %v580 = vpop.f32.mrb[0].mxu0
        %581 = vmatprep.mubr.bf16.mxu0 0
        %582 = vmatmul.mubr.bf16.gmra.mrb[0].mxu0 %v516
        %v583 = vpop.f32.mrb[0].mxu0
        %v584 = vadd.f32 %v494, %v583
        %v585 = vpop.f32.mrb[0].mxu0
        %v586 = vpop.f32.mrb[0].mxu0
        %v587 = vadd.f32 %v494, %v586
        %v588 = vpop.f32.mrb[0].mxu0
        %589 = vmatprep.mubr.bf16.mxu0 0
        %590 = vmatmul.mubr.bf16.gmra.mrb[0].mxu0 %v519
        %v591 = vpop.f32.mrb[0].mxu0
        %v592 = vadd.f32 %v494, %v591
        %v593 = vpop.f32.mrb[0].mxu0
        %v594 = vpop.f32.mrb[0].mxu0
        %v595 = vadd.f32 %v494, %v594
        %v596 = vpop.f32.mrb[0].mxu0
        %597 = vmatprep.mubr.bf16.mxu0 0
        %598 = vmatmul.mubr.bf16.gmra.mrb[0].mxu0 %v522
        %v599 = vpop.f32.mrb[0].mxu0
        %v600 = vadd.f32 %v494, %v599
        %v601 = vpop.f32.mrb[0].mxu0
        %v602 = vpop.f32.mrb[0].mxu0
        %v603 = vadd.f32 %v494, %v602
        %v604 = vpop.f32.mrb[0].mxu0
        %605 = vmatprep.mubr.bf16.mxu0 0
        %606 = vmatmul.mubr.bf16.gmra.mrb[0].mxu0 %v525
        %v607 = vpop.f32.mrb[0].mxu0
        %v608 = vadd.f32 %v494, %v607
        %v609 = vpop.f32.mrb[0].mxu0
        %v610 = vpop.f32.mrb[0].mxu0
        %v611 = vadd.f32 %v494, %v610
        %v612 = vpop.f32.mrb[0].mxu0
        %613 = vmatprep.mubr.bf16.mxu0 0
        %614 = vmatmul.mubr.bf16.gmra.mrb[0].mxu0 %v528
        %v615 = vpop.f32.mrb[0].mxu0
        %v616 = vadd.f32 %v494, %v615
        %v617 = vpop.f32.mrb[0].mxu0
        %v618 = vpop.f32.mrb[0].mxu0
        %v619 = vadd.f32 %v494, %v618
        %v620 = vpop.f32.mrb[0].mxu0
        %621 = vmatprep.mubr.bf16.mxu0 0
        %622 = vmatmul.mubr.bf16.gmra.mrb[0].mxu0 %v531
        %v623 = vpop.f32.mrb[0].mxu0
        %v624 = vadd.f32 %v494, %v623
        %v625 = vpop.f32.mrb[0].mxu0
        %v626 = vpop.f32.mrb[0].mxu0
        %v627 = vadd.f32 %v494, %v626
        %v628 = vpop.f32.mrb[0].mxu0
        %629 = vdwg.mxu0
        %v630 = vmax.f32 %v568, 0.0
        %v631 = vmax.f32 %v571, 0.0
        %v632 = vmax.f32 %v576, 0.0
        %v633 = vmax.f32 %v579, 0.0
        %v634 = vmax.f32 %v584, 0.0
        %v635 = vmax.f32 %v587, 0.0
        %v636 = vmax.f32 %v592, 0.0
        %v637 = vmax.f32 %v595, 0.0
        %v638 = vmax.f32 %v600, 0.0
        %v639 = vmax.f32 %v603, 0.0
        %v640 = vmax.f32 %v608, 0.0
        %v641 = vmax.f32 %v611, 0.0
        %v642 = vmax.f32 %v616, 0.0
        %v643 = vmax.f32 %v619, 0.0
        %v644 = vmax.f32 %v624, 0.0
        %v645 = vmax.f32 %v627, 0.0
        %v646 = vld [vmem:[%s5] sm:$0x1]
        %s647 = sld [smem:[#allocation2]]
        %v648 = vstv %s647
        %v650 = vsel %vm339, %v646, 0
        %v653 = vsel %vm339, %v630, 0
        %v656 = vsel %vm339, %v631, 0
        %v659 = vsel %vm339, %v632, 0
        %v662 = vsel %vm339, %v633, 0
        %v665 = vsel %vm339, %v634, 0
        %v668 = vsel %vm339, %v635, 0
        %v671 = vsel %vm339, %v636, 0
        %v674 = vsel %vm339, %v637, 0
        %v677 = vsel %vm339, %v638, 0
        %v680 = vsel %vm339, %v639, 0
        %v683 = vsel %vm339, %v640, 0
        %v686 = vsel %vm339, %v641, 0
        %v689 = vsel %vm339, %v642, 0
        %v692 = vsel %vm339, %v643, 0
        %v695 = vsel %vm339, %v644, 0
        %v698 = vsel %vm339, %v645, 0
        %700 = vmatprep.subr.mxu0 0.0
        %701 = vmatpush1.xpose.msra.mxu0 %v653
        %702 = vmatprep.subr.mxu0 0.0
        %703 = vmatpush1.xpose.msra.mxu0 %v656
        %704 = vmatprep.subr.mxu0 0.0
        %705 = vmatpush1.xpose.msra.mxu0 %v659
        %706 = vmatprep.subr.mxu0 0.0
        %707 = vmatpush1.xpose.msra.mxu0 %v662
        %708 = vmatprep.subr.mxu0 0.0
        %709 = vmatpush1.xpose.msra.mxu0 %v665
        %710 = vmatprep.subr.mxu0 0.0
        %711 = vmatpush1.xpose.msra.mxu0 %v668
        %712 = vmatprep.subr.mxu0 0.0
        %713 = vmatpush1.xpose.msra.mxu0 %v671
        %714 = vmatprep.subr.mxu0 0.0
        %715 = vmatpush1.xpose.msra.mxu0 %v674
        %716 = vmatprep.subr.mxu0 0.0
        %717 = vmatpush1.xpose.msra.mxu0 %v677
        %718 = vmatprep.subr.mxu0 0.0
        %719 = vmatpush1.xpose.msra.mxu0 %v680
        %720 = vmatprep.subr.mxu0 0.0
        %721 = vmatpush1.xpose.msra.mxu0 %v683
        %722 = vmatprep.subr.mxu0 0.0
        %723 = vmatpush1.xpose.msra.mxu0 %v686
        %724 = vmatprep.subr.mxu0 0.0
        %725 = vmatpush1.xpose.msra.mxu0 %v689
        %726 = vmatprep.subr.mxu0 0.0
        %727 = vmatpush1.xpose.msra.mxu0 %v692
        %728 = vmatprep.subr.mxu0 0.0
        %729 = vmatpush1.xpose.msra.mxu0 %v695
        %730 = vmatprep.subr.mxu0 0.0
        %731 = vmatpush1.xpose.msra.mxu0 %v698
        %732 = vmatprep.subr.mxu0 0.0
        %733 = vmatpush1.xpose.msra.mxu0 0.0
        %734 = vmatprep.subr.mxu0 0.0
        %735 = vmatpush1.xpose.msra.mxu0 0.0
        %736 = vmatprep.subr.mxu0 0.0
        %737 = vmatpush1.xpose.msra.mxu0 0.0
        %738 = vmatprep.subr.mxu0 0.0
        %739 = vmatpush1.xpose.msra.mxu0 0.0
        %740 = vmatprep.subr.mxu0 0.0
        %741 = vmatpush1.xpose.msra.mxu0 0.0
        %742 = vmatprep.subr.mxu0 0.0
        %743 = vmatpush1.xpose.msra.mxu0 0.0
        %744 = vmatprep.subr.mxu0 0.0
        %745 = vmatpush1.xpose.msra.mxu0 0.0
        %746 = vmatprep.subr.mxu0 0.0
        %747 = vmatpush1.xpose.msra.mxu0 0.0
        %748 = vmatprep.subr.mxu0 0.0
        %749 = vmatpush1.xpose.msra.mxu0 0.0
        %750 = vmatprep.subr.mxu0 0.0
        %751 = vmatpush1.xpose.msra.mxu0 0.0
        %752 = vmatprep.subr.mxu0 0.0
        %753 = vmatpush1.xpose.msra.mxu0 0.0
        %754 = vmatprep.subr.mxu0 0.0
        %755 = vmatpush1.xpose.msra.mxu0 0.0
        %756 = vmatprep.subr.mxu0 0.0
        %757 = vmatpush1.xpose.msra.mxu0 0.0
        %758 = vmatprep.subr.mxu0 0.0
        %759 = vmatpush1.xpose.msra.mxu0 0.0
        %760 = vmatprep.subr.mxu0 0.0
        %761 = vmatpush1.xpose.msra.mxu0 0.0
        %762 = vmatprep.subr.mxu0 0.0
        %763 = vmatpush1.xpose.msra.mxu0 0.0
        %764 = vmatprep.mubr.f32.mxu0 0.0
        %765 = vmatmul.mubr.f32.gmra.mrb[0].mxu0 %v650
        %v766 = vpop.f32.mrb[0].mxu0
        %v767 = vadd.f32 %v648, %v766
        %v768 = vpop.f32.mrb[0].mxu0
        %769 = vdwg.mxu0
        %770 = vst [vmem:[%s284] sm:$0x1] %v767
        %s771 = sand.u32 %s182, 1
        %s772 = scalar_lea.sflag [#allocation4], %s771
        %s773 = sand.u32 %s182, 1
        %s774 = scalar_lea.vmem [#allocation3], %s773
        // Predicated region
        $region49: #{tpu_custom_call.1} parent=47 // pred_check
          %p775 = pneg %p192
        $region50: #{tpu_custom_call.1} parent=47 // pred_check_branch
          %777 = sbr.rel (%p775) target = $region52
        $region51: #{tpu_custom_call.1} parent=47 // pred_region
          %s779 = ssub.s32 16, 16
          %780 = vsyncadd %s772, %s779
          %s781 = smul.addr %s22, 16
          %s782 = scalar_lea.hbm %s7, %s781
          %s784 = sshll.u32 %s774, 4
          %s785 = int_to_ptr.vmem [resolvable:$true] %s784
          %787 = dma.vmem_to_hbm [thread:$0]  %s785, 16, %s782, %s772
        $region52: #{tpu_custom_call.1} parent=47 // pred_fallthru
          _
      $region48: #{tpu_custom_call.1} parent=5 // pred_fallthru
        _
      %p788 = scmp.le.s32.totalorder 2, %s17
      // Predicated region
      $region53: #{tpu_custom_call.1} parent=5 // pred_check
        %p789 = pneg %p788
      $region54: #{tpu_custom_call.1} parent=5 // pred_check_branch
        %791 = sbr.rel (%p789) target = $region56
      $region55: #{tpu_custom_call.1} parent=5 // pred_region
        %s792 = ssub.s32 %s17, 2
        // Predicated region
        $region57: #{tpu_custom_call.1} parent=55 // pred_check
          %p793 = pneg %p198
        $region58: #{tpu_custom_call.1} parent=55 // pred_check_branch
          %795 = sbr.rel (%p793) target = $region60
        $region59: #{tpu_custom_call.1} parent=55 // pred_region
          %s796 = sand.u32 %s183, 1
          %s797 = scalar_lea.sflag [#allocation4], %s796
          %s798 = sand.u32 %s183, 1
          %s799 = scalar_lea.vmem [#allocation3], %s798
          %800 = dma.done %s797, 16
        $region60: #{tpu_custom_call.1} parent=55 // pred_fallthru
          _
      $region56: #{tpu_custom_call.1} parent=5 // pred_fallthru
        _
    $region6: #{tpu_custom_call.1} parent=1 // loop_footer
      %s21 = sadd.s32 1, %s17
    $region7: #{tpu_custom_call.1} parent=1 // loop_footer_branch
      %16 = sbr.rel target = $region3
    $region8: #{tpu_custom_call.1} parent=1 // loop_exit
      _
    %801 = vsyncpa [#allocation4], 1
    %s802 = scalar_lea.sflag [#allocation4], 1
    %803 = vsyncpa %s802, 1

</llo_original>
